<compile_context>
chip_gen: v6e
topology: v6e:2x2x1
jax: 0.10.0
libtpu: 0.0.40
codegen_flags: <defaults>
</compile_context>

<pallas_src>
import jax
import jax.numpy as jnp
from jax.experimental import pallas as pl
from jax.experimental.pallas import tpu as pltpu


def _policy_kernel(x_ref, w1_ref, b1_ref, w2_ref, b2_ref, out_ref):
    # x: (TB, S) f32, w1: (S, H), b1: (1, H), w2: (H, A), b2: (1, A)
    x = x_ref[...]

    # fc1 + ReLU (MXU matmul with f32 accumulation; bias broadcast on VPU).
    h = jnp.dot(x, w1_ref[...], preferred_element_type=jnp.float32)
    h = jnp.maximum(h + b1_ref[...], 0.0)

    # fc2
    logits = jnp.dot(h, w2_ref[...], preferred_element_type=jnp.float32)
    logits = logits + b2_ref[...]

    # Numerically stable softmax over dim=1 (action axis).  Exact divide:
    # rows must sum to 1 for downstream log-prob / entropy terms, and the
    # kernel is nowhere near compute-bound.
    m = jnp.max(logits, axis=1, keepdims=True)
    e = jnp.exp(logits - m)
    denom = jnp.sum(e, axis=1, keepdims=True)
    out_ref[...] = (e / denom).astype(out_ref.dtype)


def _choose_batch_tile(batch, block_b):
    """Bucketed batch tile: power of two in [8, block_b], >= 2 grid steps for B > 8."""
    if batch <= 8:
        return batch                       # single block; block == full dim is legal
    half = pl.cdiv(batch, 2)               # aim for at least 2 grid steps (v7x megacore)
    tb = max(8, pl.next_power_of_2(half))  # bucket -> few distinct compiles
    return min(block_b, tb)


def policy_net_forward(x, w1, b1, w2, b2, *, block_b=4096):
    """x: (B, state_dim) f32. Returns softmax probabilities (B, action_dim)."""
    B, S = x.shape
    H = w1.shape[1]
    A = w2.shape[1]
    assert block_b % 8 == 0, "block_b must be a multiple of 8 sublanes"

    TB = _choose_batch_tile(B, block_b)
    grid = (pl.cdiv(B, TB),)   # partial last block is padded on read / masked on write

    return pl.pallas_call(
        _policy_kernel,
        out_shape=jax.ShapeDtypeStruct((B, A), jnp.float32),
        grid=grid,
        in_specs=[
            pl.BlockSpec((TB, S), lambda i: (i, 0)),   # x: tiled over batch (double-buffered)
            pl.BlockSpec((S, H), lambda i: (0, 0)),    # w1: resident
            pl.BlockSpec((1, H), lambda i: (0, 0)),    # b1: resident
            pl.BlockSpec((H, A), lambda i: (0, 0)),    # w2: resident
            pl.BlockSpec((1, A), lambda i: (0, 0)),    # b2: resident
        ],
        out_specs=pl.BlockSpec((TB, A), lambda i: (i, 0)),
        compiler_params=pltpu.CompilerParams(
            dimension_semantics=("parallel",)),        # megacore batch split on v7x
    )(x, w1, b1, w2, b2)


def init_params(key, state_dim, action_dim, hidden_dim_1):
    """Deterministic init mimicking torch.nn.Linear default (U[-1/sqrt(fan_in), +])."""
    k1, k2, k3, k4 = jax.random.split(key, 4)
    bound1 = 1.0 / jnp.sqrt(state_dim)
    bound2 = 1.0 / jnp.sqrt(hidden_dim_1)
    # Stored as (in, out) == transpose of torch's (out, in) weight layout.
    w1 = jax.random.uniform(k1, (state_dim, hidden_dim_1), jnp.float32,
                            minval=-bound1, maxval=bound1)
    b1 = jax.random.uniform(k2, (1, hidden_dim_1), jnp.float32,
                            minval=-bound1, maxval=bound1)
    w2 = jax.random.uniform(k3, (hidden_dim_1, action_dim), jnp.float32,
                            minval=-bound2, maxval=bound2)
    b2 = jax.random.uniform(k4, (1, action_dim), jnp.float32,
                            minval=-bound2, maxval=bound2)
    return w1, b1, w2, b2


if __name__ == "__main__":
    state_dim = 16
    hidden_dim_1 = 32
    action_dim = 8
    # hidden_dim_2 is declared in the module's __init__ signature but unused.

    key = jax.random.PRNGKey(0)
    kx, kp, kx_mid, kx_big = jax.random.split(key, 4)
    w1, b1, w2, b2 = init_params(kp, state_dim, action_dim, hidden_dim_1)

    def reference(x):
        h = jnp.maximum(x @ w1 + b1, 0.0)
        return jax.nn.softmax(h @ w2 + b2, axis=1)

    # 1) Tiny batch: single block (block shape == full array dims).
    x = jax.random.normal(kx, (2, state_dim), jnp.float32)
    probs = jax.block_until_ready(policy_net_forward(x, w1, b1, w2, b2))
    assert probs.shape == (2, action_dim)
    assert jnp.allclose(probs, reference(x), atol=1e-5, rtol=1e-5), \
        "small-batch mismatch vs reference"
    assert jnp.allclose(jnp.sum(probs, axis=1), 1.0, atol=1e-5)

    # 2) Ragged batch: bucketed TB (=32), 2 grid steps, masked partial last block.
    x_mid = jax.random.normal(kx_mid, (40, state_dim), jnp.float32)
    probs_mid = jax.block_until_ready(policy_net_forward(x_mid, w1, b1, w2, b2))
    assert probs_mid.shape == (40, action_dim)
    assert jnp.allclose(probs_mid, reference(x_mid), atol=1e-5, rtol=1e-5), \
        "ragged-batch mismatch vs reference"
    assert jnp.allclose(jnp.sum(probs_mid, axis=1), 1.0, atol=1e-5)

    # 3) Larger batch: TB=512 bucket, 2 grid steps (both TCs on v7x).
    x_big = jax.random.normal(kx_big, (1024, state_dim), jnp.float32)
    probs_big = jax.block_until_ready(policy_net_forward(x_big, w1, b1, w2, b2))
    assert probs_big.shape == (1024, action_dim)
    assert jnp.allclose(probs_big, reference(x_big), atol=1e-5, rtol=1e-5), \
        "tiled-batch mismatch vs reference"
    assert jnp.allclose(jnp.sum(probs_big, axis=1), 1.0, atol=1e-5)

    print("KERNEL_OK")
</pallas_src>

<mosaic_0001>
module attributes {stable_mosaic.version = 11 : i64} {
  func.func @_policy_kernel(%arg0: i32, %arg1: memref<2x16xf32, #tpu.memory_space<vmem>>, %arg2: memref<16x32xf32, #tpu.memory_space<vmem>>, %arg3: memref<1x32xf32, #tpu.memory_space<vmem>>, %arg4: memref<32x8xf32, #tpu.memory_space<vmem>>, %arg5: memref<1x8xf32, #tpu.memory_space<vmem>>, %arg6: memref<2x8xf32, #tpu.memory_space<vmem>>) attributes {dimension_semantics = [#tpu.dimension_semantics<parallel>], iteration_bounds = array<i64: 1>, scalar_prefetch = 0 : i64, scratch_operands = 0 : i64, tpu.core_type = #tpu.core_type<tc>, window_params = [{transform_indices = @transform_0, window_bounds = array<i64: 2, 16>}, {pipeline_mode = #tpu.pipeline_mode<synchronous>, transform_indices = @transform_1, window_bounds = array<i64: 16, 32>}, {pipeline_mode = #tpu.pipeline_mode<synchronous>, transform_indices = @transform_2, window_bounds = array<i64: 1, 32>}, {pipeline_mode = #tpu.pipeline_mode<synchronous>, transform_indices = @transform_3, window_bounds = array<i64: 32, 8>}, {pipeline_mode = #tpu.pipeline_mode<synchronous>, transform_indices = @transform_4, window_bounds = array<i64: 1, 8>}, {transform_indices = @transform_5, window_bounds = array<i64: 2, 8>}]} {
    %c0 = arith.constant 0 : index
    %c0_0 = arith.constant 0 : index
    %0 = vector.load %arg1[%c0, %c0_0] : memref<2x16xf32, #tpu.memory_space<vmem>>, vector<2x16xf32>
    %c0_1 = arith.constant 0 : index
    %c0_2 = arith.constant 0 : index
    %1 = vector.load %arg2[%c0_1, %c0_2] : memref<16x32xf32, #tpu.memory_space<vmem>>, vector<16x32xf32>
    %cst = arith.constant dense<0.000000e+00> : vector<2x32xf32>
    %2 = tpu.matmul %0, %1, %cst {dimension_numbers = #tpu.dot_dimension_numbers<[1], [0], [0], [1], [0, 0, 1, 1], [], []>} : vector<2x16xf32>, vector<16x32xf32>, vector<2x32xf32> -> vector<2x32xf32>
    %c0_3 = arith.constant 0 : index
    %c0_4 = arith.constant 0 : index
    %3 = vector.load %arg3[%c0_3, %c0_4] : memref<1x32xf32, #tpu.memory_space<vmem>>, vector<1x32xf32>
    %4 = vector.broadcast %3 : vector<1x32xf32> to vector<2x32xf32>
    %5 = arith.addf %2, %4 : vector<2x32xf32>
    %cst_5 = arith.constant 0.000000e+00 : f32
    %6 = vector.broadcast %cst_5 : f32 to vector<2x32xf32>
    %7 = arith.maximumf %5, %6 : vector<2x32xf32>
    %c0_6 = arith.constant 0 : index
    %c0_7 = arith.constant 0 : index
    %8 = vector.load %arg4[%c0_6, %c0_7] : memref<32x8xf32, #tpu.memory_space<vmem>>, vector<32x8xf32>
    %cst_8 = arith.constant dense<0.000000e+00> : vector<2x8xf32>
    %9 = tpu.matmul %7, %8, %cst_8 {dimension_numbers = #tpu.dot_dimension_numbers<[1], [0], [0], [1], [0, 0, 1, 1], [], []>} : vector<2x32xf32>, vector<32x8xf32>, vector<2x8xf32> -> vector<2x8xf32>
    %c0_9 = arith.constant 0 : index
    %c0_10 = arith.constant 0 : index
    %10 = vector.load %arg5[%c0_9, %c0_10] : memref<1x8xf32, #tpu.memory_space<vmem>>, vector<1x8xf32>
    %11 = vector.broadcast %10 : vector<1x8xf32> to vector<2x8xf32>
    %12 = arith.addf %9, %11 : vector<2x8xf32>
    %cst_11 = arith.constant dense<0xFF800000> : vector<2xf32>
    %13 = vector.multi_reduction <maximumf>, %12, %cst_11 [1] : vector<2x8xf32> to vector<2xf32>
    %14 = vector.shape_cast %13 : vector<2xf32> to vector<2x1xf32>
    %15 = vector.broadcast %14 : vector<2x1xf32> to vector<2x8xf32>
    %16 = arith.subf %12, %15 : vector<2x8xf32>
    %17 = math.exp %16 : vector<2x8xf32>
    %cst_12 = arith.constant dense<0.000000e+00> : vector<2xf32>
    %18 = vector.multi_reduction <add>, %17, %cst_12 [1] : vector<2x8xf32> to vector<2xf32>
    %19 = vector.shape_cast %18 : vector<2xf32> to vector<2x1xf32>
    %20 = vector.broadcast %19 : vector<2x1xf32> to vector<2x8xf32>
    %21 = arith.divf %17, %20 : vector<2x8xf32>
    %c0_13 = arith.constant 0 : index
    %c0_14 = arith.constant 0 : index
    %22 = vector.load %arg6[%c0_13, %c0_14] : memref<2x8xf32, #tpu.memory_space<vmem>>, vector<2x8xf32>
    tpu.vector_store %arg6[%c0_13, %c0_14], %21 {strides = array<i32>} : memref<2x8xf32, #tpu.memory_space<vmem>>, vector<2x8xf32>,
    return
  }
  func.func @transform_0(%arg0: i32) -> (i32, i32) {
    %c0_i32 = arith.constant 0 : i32
    %c0_i32_0 = arith.constant 0 : i32
    return %arg0, %c0_i32 : i32, i32
  }
  func.func @transform_1(%arg0: i32) -> (i32, i32) {
    %c0_i32 = arith.constant 0 : i32
    %c0_i32_0 = arith.constant 0 : i32
    %c0_i32_1 = arith.constant 0 : i32
    return %c0_i32, %c0_i32_0 : i32, i32
  }
  func.func @transform_2(%arg0: i32) -> (i32, i32) {
    %c0_i32 = arith.constant 0 : i32
    %c0_i32_0 = arith.constant 0 : i32
    %c0_i32_1 = arith.constant 0 : i32
    return %c0_i32, %c0_i32_0 : i32, i32
  }
  func.func @transform_3(%arg0: i32) -> (i32, i32) {
    %c0_i32 = arith.constant 0 : i32
    %c0_i32_0 = arith.constant 0 : i32
    %c0_i32_1 = arith.constant 0 : i32
    return %c0_i32, %c0_i32_0 : i32, i32
  }
  func.func @transform_4(%arg0: i32) -> (i32, i32) {
    %c0_i32 = arith.constant 0 : i32
    %c0_i32_0 = arith.constant 0 : i32
    %c0_i32_1 = arith.constant 0 : i32
    return %c0_i32, %c0_i32_0 : i32, i32
  }
  func.func @transform_5(%arg0: i32) -> (i32, i32) {
    %c0_i32 = arith.constant 0 : i32
    %c0_i32_0 = arith.constant 0 : i32
    return %arg0, %c0_i32 : i32, i32
  }
}

</mosaic_0001>

<llo_original>
// kernel: tpu_custom_call.1
$region0: #{tpu_custom_call.1}
  #allocation0 [shape = 'u32[]', space=smem, size = 0x4, offset = 0x4, fixed_abs, tag = 'smem constant byte address 0x4 - core index']
  #allocation1 [shape = 'u32[144,128]{1,0:T(1,128)}', space=vmem, size = 0x12000, scoped, tag = 'internal scratch']
  %s0 = inlined_call_operand.vmem [shape: f32[2,16], index: 0, kind: input, shape index: {}]
  %s1 = inlined_call_operand.vmem [shape: f32[16,32], index: 1, kind: input, shape index: {}]
  %s2 = inlined_call_operand.vmem [shape: f32[1,32], index: 2, kind: input, shape index: {}]
  %s3 = inlined_call_operand.vmem [shape: f32[32,8], index: 3, kind: input, shape index: {}]
  %s4 = inlined_call_operand.vmem [shape: f32[1,8], index: 4, kind: input, shape index: {}]
  %s5 = inlined_call_operand.hbm [shape: f32[2,8], index: 5, kind: output, shape index: {}]
  %s6 = sld [smem:[#allocation0]]
  $region30: #{tpu_custom_call.1} parent=0
    _
  %s8 = ssub.s32 1, %s6
  %s9 = scalar_select 0, %s8, %s6
  $region1: #{tpu_custom_call.1} parent=0
    #allocation2 [shape = 'u8[1024]{0}', space=vmem, size = 0x400, scoped, tag = 'output window, operand 0, single buffered']
    #allocation3 [shape = 's32[1]{0}', space=sflag, size = 0x4, scoped, tag = 'scoped memory for tpu_custom_call.1']
    %10 = vsyncpa [#allocation3], 0
    // Predicated region
    $region2: #{tpu_custom_call.1} parent=1 // pred_check
      _
    $region3: #{tpu_custom_call.1} parent=1 // pred_check_branch
      %12 = sbr.rel (0) target = $region5
    $region4: #{tpu_custom_call.1} parent=1 // pred_region
      _
    $region5: #{tpu_custom_call.1} parent=1 // pred_fallthru
      _
    // Predicated region
    $region6: #{tpu_custom_call.1} parent=1 // pred_check
      _
    $region7: #{tpu_custom_call.1} parent=1 // pred_check_branch
      %14 = sbr.rel (0) target = $region9
    $region8: #{tpu_custom_call.1} parent=1 // pred_region
      _
    $region9: #{tpu_custom_call.1} parent=1 // pred_fallthru
      _
    // Predicated region
    $region10: #{tpu_custom_call.1} parent=1 // pred_check
      _
    $region11: #{tpu_custom_call.1} parent=1 // pred_check_branch
      %16 = sbr.rel (0) target = $region13
    $region12: #{tpu_custom_call.1} parent=1 // pred_region
      _
    $region13: #{tpu_custom_call.1} parent=1 // pred_fallthru
      _
    // Predicated region
    $region14: #{tpu_custom_call.1} parent=1 // pred_check
      _
    $region15: #{tpu_custom_call.1} parent=1 // pred_check_branch
      %18 = sbr.rel (0) target = $region17
    $region16: #{tpu_custom_call.1} parent=1 // pred_region
      _
    $region17: #{tpu_custom_call.1} parent=1 // pred_fallthru
      _
    // Predicated region
    $region18: #{tpu_custom_call.1} parent=1 // pred_check
      _
    $region19: #{tpu_custom_call.1} parent=1 // pred_check_branch
      %20 = sbr.rel (0) target = $region21
    $region20: #{tpu_custom_call.1} parent=1 // pred_region
      _
    $region21: #{tpu_custom_call.1} parent=1 // pred_fallthru
      _
    %v21 = vld [vmem:[%s0] sm:$0x3]
    %v22 = vld [vmem:[%s1] sm:$0xff]
    %v23 = vld [vmem:[%s1 + $0x8] sm:$0xff]
    %v24 = vld [vmem:[%s2] sm:$0x1]
    %v26 = vlaneseq
    %v27 = vshrl.u32 %v26, 7
    %v28 = vsub.s32 0, %v27
    %v29 = vrot.slane %v24, %v28
    %vm31 = vcmask 130048
    %v33 = vsel %vm31, %v21, 0
    %35 = vmatprep.subr.mxu0 0.0
    %36 = vmatpush1.msra.mxu0 0.0
    %37 = vmatprep.subr.mxu0 0.0
    %38 = vmatpush1.msra.mxu0 0.0
    %39 = vmatprep.subr.mxu0 0.0
    %40 = vmatpush1.msra.mxu0 0.0
    %41 = vmatprep.subr.mxu0 0.0
    %42 = vmatpush1.msra.mxu0 0.0
    %43 = vmatprep.subr.mxu0 0.0
    %44 = vmatpush1.msra.mxu0 0.0
    %45 = vmatprep.subr.mxu0 0.0
    %46 = vmatpush1.msra.mxu0 0.0
    %47 = vmatprep.subr.mxu0 0.0
    %48 = vmatpush1.msra.mxu0 0.0
    %49 = vmatprep.subr.mxu0 0.0
    %50 = vmatpush1.msra.mxu0 0.0
    %51 = vmatprep.subr.mxu0 0.0
    %52 = vmatpush1.msra.mxu0 0.0
    %53 = vmatprep.subr.mxu0 0.0
    %54 = vmatpush1.msra.mxu0 0.0
    %55 = vmatprep.subr.mxu0 0.0
    %56 = vmatpush1.msra.mxu0 0.0
    %57 = vmatprep.subr.mxu0 0.0
    %58 = vmatpush1.msra.mxu0 0.0
    %59 = vmatprep.subr.mxu0 0.0
    %60 = vmatpush1.msra.mxu0 0.0
    %61 = vmatprep.subr.mxu0 0.0
    %62 = vmatpush1.msra.mxu0 0.0
    %63 = vmatprep.subr.mxu0 0.0
    %64 = vmatpush1.msra.mxu0 %v23
    %65 = vmatprep.subr.mxu0 0.0
    %66 = vmatpush1.msra.mxu0 %v22
    %67 = vmatprep.subr.mxu0 0.0
    %68 = vmatpush2.msra.mxu0 0.0
    %69 = vmatprep.subr.mxu0 0.0
    %70 = vmatpush2.msra.mxu0 0.0
    %71 = vmatprep.subr.mxu0 0.0
    %72 = vmatpush2.msra.mxu0 0.0
    %73 = vmatprep.subr.mxu0 0.0
    %74 = vmatpush2.msra.mxu0 0.0
    %75 = vmatprep.subr.mxu0 0.0
    %76 = vmatpush2.msra.mxu0 0.0
    %77 = vmatprep.subr.mxu0 0.0
    %78 = vmatpush2.msra.mxu0 0.0
    %79 = vmatprep.subr.mxu0 0.0
    %80 = vmatpush2.msra.mxu0 0.0
    %81 = vmatprep.subr.mxu0 0.0
    %82 = vmatpush2.msra.mxu0 0.0
    %83 = vmatprep.subr.mxu0 0.0
    %84 = vmatpush2.msra.mxu0 0.0
    %85 = vmatprep.subr.mxu0 0.0
    %86 = vmatpush2.msra.mxu0 0.0
    %87 = vmatprep.subr.mxu0 0.0
    %88 = vmatpush2.msra.mxu0 0.0
    %89 = vmatprep.subr.mxu0 0.0
    %90 = vmatpush2.msra.mxu0 0.0
    %91 = vmatprep.subr.mxu0 0.0
    %92 = vmatpush2.msra.mxu0 0.0
    %93 = vmatprep.subr.mxu0 0.0
    %94 = vmatpush2.msra.mxu0 0.0
    %95 = vmatprep.subr.mxu0 0.0
    %96 = vmatpush2.msra.mxu0 0.0
    %97 = vmatprep.subr.mxu0 0.0
    %98 = vmatpush2.msra.mxu0 0.0
    %99 = vmatprep.mubr.f32.mxu0 0.0
    %100 = vmatmul.mubr.f32.gmra.mxu0 %v33
    %v101 = vpop.f32.mrf.mxu0
    %v102 = vadd.f32 %v29, %v101
    %v103 = vpop.f32.mrf.mxu0
    %104 = vdwg.mxu0
    %v105 = vmax.f32 %v102, 0.0
    %v106 = vld [vmem:[%s3] sm:$0xff]
    %v107 = vld [vmem:[%s3 + $0x8] sm:$0xff]
    %v108 = vld [vmem:[%s3 + $0x10] sm:$0xff]
    %v109 = vld [vmem:[%s3 + $0x18] sm:$0xff]
    %v110 = vld [vmem:[%s4] sm:$0x1]
    %v112 = vlaneseq
    %v113 = vshrl.u32 %v112, 7
    %v114 = vsub.s32 0, %v113
    %v115 = vrot.slane %v110, %v114
    %vm117 = vcmask 261120
    %v119 = vsel %vm117, %v105, 0
    %121 = vmatprep.subr.mxu0 0.0
    %122 = vmatpush1.msra.mxu0 0.0
    %123 = vmatprep.subr.mxu0 0.0
    %124 = vmatpush1.msra.mxu0 0.0
    %125 = vmatprep.subr.mxu0 0.0
    %126 = vmatpush1.msra.mxu0 0.0
    %127 = vmatprep.subr.mxu0 0.0
    %128 = vmatpush1.msra.mxu0 0.0
    %129 = vmatprep.subr.mxu0 0.0
    %130 = vmatpush1.msra.mxu0 0.0
    %131 = vmatprep.subr.mxu0 0.0
    %132 = vmatpush1.msra.mxu0 0.0
    %133 = vmatprep.subr.mxu0 0.0
    %134 = vmatpush1.msra.mxu0 0.0
    %135 = vmatprep.subr.mxu0 0.0
    %136 = vmatpush1.msra.mxu0 0.0
    %137 = vmatprep.subr.mxu0 0.0
    %138 = vmatpush1.msra.mxu0 0.0
    %139 = vmatprep.subr.mxu0 0.0
    %140 = vmatpush1.msra.mxu0 0.0
    %141 = vmatprep.subr.mxu0 0.0
    %142 = vmatpush1.msra.mxu0 0.0
    %143 = vmatprep.subr.mxu0 0.0
    %144 = vmatpush1.msra.mxu0 0.0
    %145 = vmatprep.subr.mxu0 0.0
    %146 = vmatpush1.msra.mxu0 %v109
    %147 = vmatprep.subr.mxu0 0.0
    %148 = vmatpush1.msra.mxu0 %v108
    %149 = vmatprep.subr.mxu0 0.0
    %150 = vmatpush1.msra.mxu0 %v107
    %151 = vmatprep.subr.mxu0 0.0
    %152 = vmatpush1.msra.mxu0 %v106
    %153 = vmatprep.subr.mxu0 0.0
    %154 = vmatpush2.msra.mxu0 0.0
    %155 = vmatprep.subr.mxu0 0.0
    %156 = vmatpush2.msra.mxu0 0.0
    %157 = vmatprep.subr.mxu0 0.0
    %158 = vmatpush2.msra.mxu0 0.0
    %159 = vmatprep.subr.mxu0 0.0
    %160 = vmatpush2.msra.mxu0 0.0
    %161 = vmatprep.subr.mxu0 0.0
    %162 = vmatpush2.msra.mxu0 0.0
    %163 = vmatprep.subr.mxu0 0.0
    %164 = vmatpush2.msra.mxu0 0.0
    %165 = vmatprep.subr.mxu0 0.0
    %166 = vmatpush2.msra.mxu0 0.0
    %167 = vmatprep.subr.mxu0 0.0
    %168 = vmatpush2.msra.mxu0 0.0
    %169 = vmatprep.subr.mxu0 0.0
    %170 = vmatpush2.msra.mxu0 0.0
    %171 = vmatprep.subr.mxu0 0.0
    %172 = vmatpush2.msra.mxu0 0.0
    %173 = vmatprep.subr.mxu0 0.0
    %174 = vmatpush2.msra.mxu0 0.0
    %175 = vmatprep.subr.mxu0 0.0
    %176 = vmatpush2.msra.mxu0 0.0
    %177 = vmatprep.subr.mxu0 0.0
    %178 = vmatpush2.msra.mxu0 0.0
    %179 = vmatprep.subr.mxu0 0.0
    %180 = vmatpush2.msra.mxu0 0.0
    %181 = vmatprep.subr.mxu0 0.0
    %182 = vmatpush2.msra.mxu0 0.0
    %183 = vmatprep.subr.mxu0 0.0
    %184 = vmatpush2.msra.mxu0 0.0
    %185 = vmatprep.mubr.f32.mxu0 0.0
    %186 = vmatmul.mubr.f32.gmra.mxu0 %v119
    %v187 = vpop.f32.mrf.mxu0
    %v188 = vadd.f32 %v115, %v187
    %v189 = vpop.f32.mrf.mxu0
    %190 = vdwg.mxu0
    %vm191 = vcmask 58368
    %v192 = vsel %vm191, %v188, -inf
    %193 = vmax.xlane.f32.xlu0 %v192
    %v194 = vpop.xlane.xlu0 %193
    %v195 = vsub.f32 %v188, %v194
    %v196 = vmul.f32 %v195, 1.442695
    %v197 = vpow.pop %v196
    %v198 = vsel %vm191, %v197, 0.0
    %199 = vadd.xlane.f32.xlu0 %v198
    %v200 = vpop.xlane.xlu0 %199
    %v201 = vrcp.pop %v200
    %v202 = vmul.f32 %v197, %v201
    %203 = vst.msk [vmem:[#allocation2] sm:$0x3] %vm191, %v202
    // Predicated region
    $region22: #{tpu_custom_call.1} parent=1 // pred_check
      _
    $region23: #{tpu_custom_call.1} parent=1 // pred_check_branch
      %205 = sbr.rel (0) target = $region25
    $region24: #{tpu_custom_call.1} parent=1 // pred_region
      %s207 = ssub.s32 32, 32
      %208 = vsyncadd [#allocation3], %s207
      %s210 = sshll.u32 [#allocation2], 4
      %s211 = int_to_ptr.vmem [resolvable:$true] %s210
      %213 = dma.vmem_to_hbm [thread:$0]  %s211, 32, %s5, [#allocation3]
    $region25: #{tpu_custom_call.1} parent=1 // pred_fallthru
      _
    // Predicated region
    $region26: #{tpu_custom_call.1} parent=1 // pred_check
      _
    $region27: #{tpu_custom_call.1} parent=1 // pred_check_branch
      %215 = sbr.rel (0) target = $region29
    $region28: #{tpu_custom_call.1} parent=1 // pred_region
      %216 = dma.done [#allocation3], 32
    $region29: #{tpu_custom_call.1} parent=1 // pred_fallthru
      _
    %217 = vsyncpa [#allocation3], 1

</llo_original>
